<compile_context>
chip_gen: v5e
topology: v5e:2x2
jax: 0.10.0
libtpu: 0.0.40
codegen_flags: <defaults>
</compile_context>

<pallas_src>
import functools
import math

import jax
import jax.numpy as jnp
from jax.experimental import pallas as pl
from jax.experimental.pallas import tpu as pltpu

EPS = 1e-5
_MiB = 1 << 20


def _round_up(x, m):
    return (x + m - 1) // m * m


def _pad2d(a, rows, cols):
    r, c = a.shape
    return jnp.pad(a, ((0, rows - r), (0, cols - c)))


def _vmem_limit(est_bytes):
    est = int(est_bytes * 1.25) + 2 * _MiB
    return max(32 * _MiB, min(est, 64 * _MiB))


def _make_stats_kernel(block_rows, n_valid, n_tiles, matmul_dtype, spill):
    """Pass 1: h = relu(x @ w1 + b1); per-tile partial channel sum / sumsq.

    Per-tile partial outputs (instead of a revisited (1,H) accumulator) keep the row
    axis 'parallel' so v7x's two TensorCores can split it.  Padded rows are masked
    out of the statistics only on the last tile.
    """
    full_tiles = (n_valid % block_rows) == 0

    def kernel(x_ref, w1_ref, b1_ref, *out_refs):
        sum_ref, sumsq_ref = out_refs[0], out_refs[1]

        # In-kernel cast to the MXU dtype (free under the matmul).
        x = x_ref[...].astype(matmul_dtype)
        h = jnp.dot(x, w1_ref[...], preferred_element_type=jnp.float32)
        h = jnp.maximum(h + b1_ref[...], 0.0)

        if spill:
            out_refs[2][...] = h.astype(out_refs[2].dtype)

        def write_stats(hm):
            s = jnp.sum(hm, axis=0, keepdims=True)           # (1, H_p) XLU reduce
            ss = jnp.sum(hm * hm, axis=0, keepdims=True)
            sum_ref[...] = jnp.broadcast_to(s, sum_ref.shape)
            sumsq_ref[...] = jnp.broadcast_to(ss, sumsq_ref.shape)

        if full_tiles:
            write_stats(h)
        else:
            i = pl.program_id(0)
            last = n_tiles - 1

            @pl.when(i == last)
            def _():
                row = last * block_rows + jax.lax.broadcasted_iota(
                    jnp.int32, (block_rows, 1), 0)
                write_stats(jnp.where(row < n_valid, h, 0.0))

            @pl.when(i != last)
            def _():
                write_stats(h)

    return kernel


def _make_proj_recompute_kernel(matmul_dtype):
    """Pass 2 (recompute path): out = (relu(x @ w1 + b1) * scale) @ w2 + b2_eff."""

    def kernel(x_ref, w1_ref, b1_ref, scale_ref, w2_ref, b2_ref, o_ref):
        x = x_ref[...].astype(matmul_dtype)
        h = jnp.dot(x, w1_ref[...], preferred_element_type=jnp.float32)
        h = jnp.maximum(h + b1_ref[...], 0.0)
        hs = (h * scale_ref[...]).astype(matmul_dtype)        # BN scale: VPU filler
        o_ref[...] = (
            jnp.dot(hs, w2_ref[...], preferred_element_type=jnp.float32) + b2_ref[...]
        ).astype(o_ref.dtype)

    return kernel


def _make_proj_spill_kernel(matmul_dtype):
    """Pass 2 (spill path): out = (h_spilled * scale) @ w2 + b2_eff."""

    def kernel(h_ref, scale_ref, w2_ref, b2_ref, o_ref):
        hs = (h_ref[...].astype(jnp.float32) * scale_ref[...]).astype(matmul_dtype)
        o_ref[...] = (
            jnp.dot(hs, w2_ref[...], preferred_element_type=jnp.float32) + b2_ref[...]
        ).astype(o_ref.dtype)

    return kernel


def ffn_forward(x, w1, b1, gamma, beta, w2, b2, *, block_rows=512,
                matmul_dtype=jnp.bfloat16, out_dtype=jnp.float32,
                recompute_h=None):
    """x: (B, L, Din) -> (B, L, Dout). Training-mode BatchNorm1d over hidden channels."""
    B, L, Din = x.shape
    H = w1.shape[1]
    Dout = w2.shape[1]
    N = B * L

    msize = jnp.dtype(matmul_dtype).itemsize
    osize = jnp.dtype(out_dtype).itemsize

    # Lane-align feature dims (128); sublane-align row tiles (16 covers f32 & bf16).
    Din_p = _round_up(Din, 128)
    H_p = _round_up(H, 128)
    Dout_p = _round_up(Dout, 128)

    # Spill-vs-recompute: below the flops/byte crossover (Din ~<600 on v7x, ~<1300 on
    # v6e) recomputing h in pass 2 beats round-tripping N*H through HBM.
    if recompute_h is None:
        recompute_h = Din_p <= 512
    spill = not recompute_h

    # ---- VMEM budgeting: resident (grid-invariant) blocks + per-row (double-buffered) ----
    # Invariant blocks counted twice (they may still be double-buffered; pipeline_mode=
    # pl.Buffered(1) on those specs would reclaim the duplicate — left off pending
    # verification via the VMEM report).
    res1 = 2 * (Din_p * H_p * msize + H_p * 4)
    per_row1 = 2 * Din_p * 4 + (2 * H_p * msize if spill else 0)
    stats_bytes = 2 * 2 * 8 * H_p * 4
    if recompute_h:
        res2 = 2 * (Din_p * H_p * msize + 2 * H_p * 4 + H_p * Dout_p * msize + Dout_p * 4)
        per_row2 = 2 * (Din_p * 4 + Dout_p * osize)
    else:
        res2 = 2 * (H_p * 4 + H_p * Dout_p * msize + Dout_p * 4)
        per_row2 = 2 * (H_p * msize + Dout_p * osize)

    # Largest row tile that fits a conservative per-TensorCore budget (v7x: 64 MiB VMEM).
    budget = 48 * _MiB
    tm = min(_round_up(block_rows, 16), _round_up(N, 16))
    res_max = max(res1 + stats_bytes, res2)
    per_row_max = max(per_row1, per_row2)
    if res_max + 16 * per_row_max <= budget:
        tm_cap = max(16, ((budget - res_max) // per_row_max) // 16 * 16)
        tm = min(tm, tm_cap)
    # TODO(synk): add an inner "arbitrary" K-tiled contraction axis with a VMEM f32
    # accumulator when resident weights alone exceed the per-core VMEM budget
    # (very large Din/H/Dout, especially under v7x's 64 MiB).

    N_p = _round_up(N, tm)
    n_tiles = N_p // tm

    # Prep: pad only; x is cast to the MXU dtype inside the kernels.  In a full model the
    # weight padding/casting below is loop-invariant and should be hoisted/jitted once.
    x2d = _pad2d(x.reshape(N, Din).astype(jnp.float32), N_p, Din_p)
    w1_p = _pad2d(w1.astype(jnp.float32), Din_p, H_p).astype(matmul_dtype)
    b1_p = _pad2d(b1.reshape(1, H).astype(jnp.float32), 1, H_p)
    w2_p = _pad2d(w2.astype(jnp.float32), H_p, Dout_p).astype(matmul_dtype)

    # ---------------- pass 1: linear1 + ReLU, per-tile channel statistics ----------------
    stats_block = pl.BlockSpec((1, 8, H_p), lambda i: (i, 0, 0))
    out_shape1 = [jax.ShapeDtypeStruct((n_tiles, 8, H_p), jnp.float32),
                  jax.ShapeDtypeStruct((n_tiles, 8, H_p), jnp.float32)]
    out_specs1 = [stats_block, stats_block]
    if spill:
        out_shape1.append(jax.ShapeDtypeStruct((N_p, H_p), matmul_dtype))
        out_specs1.append(pl.BlockSpec((tm, H_p), lambda i: (i, 0)))

    res_p1 = pl.pallas_call(
        _make_stats_kernel(tm, N, n_tiles, matmul_dtype, spill),
        out_shape=tuple(out_shape1),
        grid=(n_tiles,),
        in_specs=[
            pl.BlockSpec((tm, Din_p), lambda i: (i, 0)),      # x row tile
            pl.BlockSpec((Din_p, H_p), lambda i: (0, 0)),     # w1 resident
            pl.BlockSpec((1, H_p), lambda i: (0, 0)),         # b1 resident
        ],
        out_specs=tuple(out_specs1),
        compiler_params=pltpu.CompilerParams(
            dimension_semantics=("parallel",),
            vmem_limit_bytes=_vmem_limit(res1 + stats_bytes + per_row1 * tm),
        ),
    )(x2d, w1_p, b1_p)

    sum_parts, sumsq_parts = res_p1[0], res_p1[1]
    h_spill = res_p1[2] if spill else None

    # ------------- fold BatchNorm (tiny (H,)-sized math, training-mode stats) -------------
    s = jnp.sum(sum_parts[:, 0, :H], axis=0)
    ss = jnp.sum(sumsq_parts[:, 0, :H], axis=0)
    mean = s / N
    var = jnp.maximum(ss / N - mean * mean, 0.0)              # biased variance
    scale = gamma.reshape(H) * jax.lax.rsqrt(var + EPS)       # (H,)
    shift = beta.reshape(H) - mean * scale
    b2_eff = jnp.dot(shift, w2.astype(jnp.float32),
                     precision=jax.lax.Precision.HIGHEST) + b2.reshape(Dout)

    scale_p = _pad2d(scale.reshape(1, H), 1, H_p)
    b2_eff_p = _pad2d(b2_eff.reshape(1, Dout), 1, Dout_p)

    # ---------------------- pass 2: out = (h * scale) @ w2 + b2_eff ----------------------
    out_spec = pl.BlockSpec((tm, Dout_p), lambda i: (i, 0))
    compiler2 = pltpu.CompilerParams(
        dimension_semantics=("parallel",),
        vmem_limit_bytes=_vmem_limit(res2 + per_row2 * tm),
    )
    if recompute_h:
        out_p = pl.pallas_call(
            _make_proj_recompute_kernel(matmul_dtype),
            out_shape=jax.ShapeDtypeStruct((N_p, Dout_p), out_dtype),
            grid=(n_tiles,),
            in_specs=[
                pl.BlockSpec((tm, Din_p), lambda i: (i, 0)),      # x row tile
                pl.BlockSpec((Din_p, H_p), lambda i: (0, 0)),     # w1 resident
                pl.BlockSpec((1, H_p), lambda i: (0, 0)),         # b1 resident
                pl.BlockSpec((1, H_p), lambda i: (0, 0)),         # BN scale resident
                pl.BlockSpec((H_p, Dout_p), lambda i: (0, 0)),    # w2 resident
                pl.BlockSpec((1, Dout_p), lambda i: (0, 0)),      # folded bias resident
            ],
            out_specs=out_spec,
            compiler_params=compiler2,
        )(x2d, w1_p, b1_p, scale_p, w2_p, b2_eff_p)
    else:
        out_p = pl.pallas_call(
            _make_proj_spill_kernel(matmul_dtype),
            out_shape=jax.ShapeDtypeStruct((N_p, Dout_p), out_dtype),
            grid=(n_tiles,),
            in_specs=[
                pl.BlockSpec((tm, H_p), lambda i: (i, 0)),        # spilled h row tile
                pl.BlockSpec((1, H_p), lambda i: (0, 0)),         # BN scale resident
                pl.BlockSpec((H_p, Dout_p), lambda i: (0, 0)),    # w2 resident
                pl.BlockSpec((1, Dout_p), lambda i: (0, 0)),      # folded bias resident
            ],
            out_specs=out_spec,
            compiler_params=compiler2,
        )(h_spill, scale_p, w2_p, b2_eff_p)

    if N_p == N and Dout_p == Dout:
        out2d = out_p                                             # no slice-copy needed
    else:
        out2d = out_p[:N, :Dout]
    return out2d.reshape(B, L, Dout)


def init_params(key, input_dim, hidden_dim, output_dim):
    k1, k2, k3 = jax.random.split(key, 3)

    # linear1: xavier_uniform weight, zero bias (as in the module __init__).
    bound1 = math.sqrt(6.0 / (input_dim + hidden_dim))
    # PyTorch weight is (H, Din); we store the transpose (Din, H).
    w1 = jax.random.uniform(k1, (input_dim, hidden_dim), jnp.float32, -bound1, bound1)
    b1 = jnp.zeros((1, hidden_dim), jnp.float32)

    # BatchNorm1d default init
    gamma = jnp.ones((1, hidden_dim), jnp.float32)
    beta = jnp.zeros((1, hidden_dim), jnp.float32)

    # linear2: PyTorch default init U(-1/sqrt(fan_in), 1/sqrt(fan_in))
    bound2 = 1.0 / math.sqrt(hidden_dim)
    w2 = jax.random.uniform(k2, (hidden_dim, output_dim), jnp.float32, -bound2, bound2)
    b2 = jax.random.uniform(k3, (1, output_dim), jnp.float32, -bound2, bound2)

    return w1, b1, gamma, beta, w2, b2


def ffn_reference(x, w1, b1, gamma, beta, w2, b2):
    """Plain-JAX f32 reference of the same forward pass (for sanity checking)."""
    hp = jax.lax.Precision.HIGHEST
    h = jnp.maximum(jnp.einsum("bld,dh->blh", x, w1, precision=hp) + b1[0], 0.0)
    mean = jnp.mean(h, axis=(0, 1), keepdims=True)
    var = jnp.mean((h - mean) ** 2, axis=(0, 1), keepdims=True)
    h = (h - mean) * jax.lax.rsqrt(var + EPS) * gamma[0] + beta[0]
    return jnp.einsum("blh,ho->blo", h, w2, precision=hp) + b2[0]


if __name__ == "__main__":
    # N = B*L = 18 is deliberately not a multiple of the 16-row tile so the
    # last-tile padded-row masking in the stats pass is exercised (2 row tiles).
    B, L = 2, 9
    input_dim, hidden_dim, output_dim = 16, 32, 16

    key = jax.random.PRNGKey(0)
    kx, kp = jax.random.split(key)

    x = jax.random.normal(kx, (B, L, input_dim), jnp.float32)
    params = init_params(kp, input_dim, hidden_dim, output_dim)

    ref = ffn_reference(x, *params)

    # Fast path: bf16 MXU inputs, f32 accumulation, h recomputed in pass 2 (no HBM spill).
    fwd_bf16 = jax.jit(functools.partial(
        ffn_forward, block_rows=16, matmul_dtype=jnp.bfloat16))
    out_bf16 = jax.block_until_ready(fwd_bf16(x, *params))
    assert out_bf16.shape == (B, L, output_dim)
    assert jnp.allclose(out_bf16, ref, atol=5e-2, rtol=5e-2)

    # f32 parity path through the spill variant (exercises the second pass-2 kernel).
    fwd_f32 = jax.jit(functools.partial(
        ffn_forward, block_rows=16, matmul_dtype=jnp.float32, recompute_h=False))
    out_f32 = jax.block_until_ready(fwd_f32(x, *params))
    assert out_f32.shape == (B, L, output_dim)
    assert jnp.allclose(out_f32, ref, atol=2e-2, rtol=2e-2)

    print("KERNEL_OK")
</pallas_src>

<mosaic_0001>
module attributes {stable_mosaic.version = 11 : i64} {
  func.func @kernel(%arg0: i32, %arg1: memref<16x128xf32, #tpu.memory_space<vmem>>, %arg2: memref<128x128xbf16, #tpu.memory_space<vmem>>, %arg3: memref<1x128xf32, #tpu.memory_space<vmem>>, %arg4: memref<1x8x128xf32, #tpu.memory_space<vmem>>, %arg5: memref<1x8x128xf32, #tpu.memory_space<vmem>>) attributes {dimension_semantics = [#tpu.dimension_semantics<parallel>], iteration_bounds = array<i64: 2>, scalar_prefetch = 0 : i64, scratch_operands = 0 : i64, tpu.core_type = #tpu.core_type<tc>, window_params = [{transform_indices = @transform_0, window_bounds = array<i64: 16, 128>}, {pipeline_mode = #tpu.pipeline_mode<synchronous>, transform_indices = @transform_1, window_bounds = array<i64: 128, 128>}, {pipeline_mode = #tpu.pipeline_mode<synchronous>, transform_indices = @transform_2, window_bounds = array<i64: 1, 128>}, {transform_indices = @transform_3, window_bounds = array<i64: 1, 8, 128>}, {transform_indices = @transform_4, window_bounds = array<i64: 1, 8, 128>}]} {
    %c0 = arith.constant 0 : index
    %c0_0 = arith.constant 0 : index
    %0 = vector.load %arg1[%c0, %c0_0] : memref<16x128xf32, #tpu.memory_space<vmem>>, vector<16x128xf32>
    %1 = arith.truncf %0 : vector<16x128xf32> to vector<16x128xbf16>
    %c0_1 = arith.constant 0 : index
    %c0_2 = arith.constant 0 : index
    %2 = vector.load %arg2[%c0_1, %c0_2] : memref<128x128xbf16, #tpu.memory_space<vmem>>, vector<128x128xbf16>
    %cst = arith.constant dense<0.000000e+00> : vector<16x128xf32>
    %3 = tpu.matmul %1, %2, %cst {dimension_numbers = #tpu.dot_dimension_numbers<[1], [0], [0], [1], [0, 0, 1, 1], [], []>} : vector<16x128xbf16>, vector<128x128xbf16>, vector<16x128xf32> -> vector<16x128xf32>
    %c0_3 = arith.constant 0 : index
    %c0_4 = arith.constant 0 : index
    %4 = vector.load %arg3[%c0_3, %c0_4] : memref<1x128xf32, #tpu.memory_space<vmem>>, vector<1x128xf32>
    %5 = vector.broadcast %4 : vector<1x128xf32> to vector<16x128xf32>
    %6 = arith.addf %3, %5 : vector<16x128xf32>
    %cst_5 = arith.constant 0.000000e+00 : f32
    %7 = vector.broadcast %cst_5 : f32 to vector<16x128xf32>
    %8 = arith.maximumf %6, %7 : vector<16x128xf32>
    %c1_i32 = arith.constant 1 : i32
    %9 = arith.cmpi eq, %arg0, %c1_i32 : i32
    %10 = arith.extui %9 : i1 to i32
    %c0_i32 = arith.constant 0 : i32
    %11 = arith.cmpi ne, %10, %c0_i32 : i32
    scf.if %11 {
      %15 = tpu.iota {dimensions = array<i32: 0>} : vector<16x1xi32>
      %c16_i32 = arith.constant 16 : i32
      %16 = vector.broadcast %c16_i32 : i32 to vector<16x1xi32>
      %17 = arith.addi %16, %15 : vector<16x1xi32>
      %c18_i32 = arith.constant 18 : i32
      %18 = vector.broadcast %c18_i32 : i32 to vector<16x1xi32>
      %19 = arith.cmpi slt, %17, %18 : vector<16x1xi32>
      %cst_8 = arith.constant 0.000000e+00 : f32
      %20 = vector.shape_cast %19 : vector<16x1xi1> to vector<16x1xi1>
      %21 = vector.broadcast %20 : vector<16x1xi1> to vector<16x128xi1>
      %22 = vector.broadcast %cst_8 : f32 to vector<16x128xf32>
      %23 = arith.select %21, %8, %22 : vector<16x128xi1>, vector<16x128xf32>
      %cst_9 = arith.constant dense<0.000000e+00> : vector<128xf32>
      %24 = vector.multi_reduction <add>, %23, %cst_9 [0] : vector<16x128xf32> to vector<128xf32>
      %25 = vector.shape_cast %24 : vector<128xf32> to vector<1x128xf32>
      %26 = arith.mulf %23, %23 : vector<16x128xf32>
      %cst_10 = arith.constant dense<0.000000e+00> : vector<128xf32>
      %27 = vector.multi_reduction <add>, %26, %cst_10 [0] : vector<16x128xf32> to vector<128xf32>
      %28 = vector.shape_cast %27 : vector<128xf32> to vector<1x128xf32>
      %29 = vector.shape_cast %25 : vector<1x128xf32> to vector<1x1x128xf32>
      %30 = vector.broadcast %29 : vector<1x1x128xf32> to vector<1x8x128xf32>
      %c0_11 = arith.constant 0 : index
      %c0_12 = arith.constant 0 : index
      %c0_13 = arith.constant 0 : index
      %31 = vector.load %arg4[%c0_11, %c0_12, %c0_13] : memref<1x8x128xf32, #tpu.memory_space<vmem>>, vector<1x8x128xf32>
      tpu.vector_store %arg4[%c0_11, %c0_12, %c0_13], %30 {strides = array<i32>} : memref<1x8x128xf32, #tpu.memory_space<vmem>>, vector<1x8x128xf32>,
      %32 = vector.shape_cast %28 : vector<1x128xf32> to vector<1x1x128xf32>
      %33 = vector.broadcast %32 : vector<1x1x128xf32> to vector<1x8x128xf32>
      %c0_14 = arith.constant 0 : index
      %c0_15 = arith.constant 0 : index
      %c0_16 = arith.constant 0 : index
      %34 = vector.load %arg5[%c0_14, %c0_15, %c0_16] : memref<1x8x128xf32, #tpu.memory_space<vmem>>, vector<1x8x128xf32>
      tpu.vector_store %arg5[%c0_14, %c0_15, %c0_16], %33 {strides = array<i32>} : memref<1x8x128xf32, #tpu.memory_space<vmem>>, vector<1x8x128xf32>,
    } else {
    }
    %c1_i32_6 = arith.constant 1 : i32
    %12 = arith.cmpi ne, %arg0, %c1_i32_6 : i32
    %13 = arith.extui %12 : i1 to i32
    %c0_i32_7 = arith.constant 0 : i32
    %14 = arith.cmpi ne, %13, %c0_i32_7 : i32
    scf.if %14 {
      %cst_8 = arith.constant dense<0.000000e+00> : vector<128xf32>
      %15 = vector.multi_reduction <add>, %8, %cst_8 [0] : vector<16x128xf32> to vector<128xf32>
      %16 = vector.shape_cast %15 : vector<128xf32> to vector<1x128xf32>
      %17 = arith.mulf %8, %8 : vector<16x128xf32>
      %cst_9 = arith.constant dense<0.000000e+00> : vector<128xf32>
      %18 = vector.multi_reduction <add>, %17, %cst_9 [0] : vector<16x128xf32> to vector<128xf32>
      %19 = vector.shape_cast %18 : vector<128xf32> to vector<1x128xf32>
      %20 = vector.shape_cast %16 : vector<1x128xf32> to vector<1x1x128xf32>
      %21 = vector.broadcast %20 : vector<1x1x128xf32> to vector<1x8x128xf32>
      %c0_10 = arith.constant 0 : index
      %c0_11 = arith.constant 0 : index
      %c0_12 = arith.constant 0 : index
      %22 = vector.load %arg4[%c0_10, %c0_11, %c0_12] : memref<1x8x128xf32, #tpu.memory_space<vmem>>, vector<1x8x128xf32>
      tpu.vector_store %arg4[%c0_10, %c0_11, %c0_12], %21 {strides = array<i32>} : memref<1x8x128xf32, #tpu.memory_space<vmem>>, vector<1x8x128xf32>,
      %23 = vector.shape_cast %19 : vector<1x128xf32> to vector<1x1x128xf32>
      %24 = vector.broadcast %23 : vector<1x1x128xf32> to vector<1x8x128xf32>
      %c0_13 = arith.constant 0 : index
      %c0_14 = arith.constant 0 : index
      %c0_15 = arith.constant 0 : index
      %25 = vector.load %arg5[%c0_13, %c0_14, %c0_15] : memref<1x8x128xf32, #tpu.memory_space<vmem>>, vector<1x8x128xf32>
      tpu.vector_store %arg5[%c0_13, %c0_14, %c0_15], %24 {strides = array<i32>} : memref<1x8x128xf32, #tpu.memory_space<vmem>>, vector<1x8x128xf32>,
    } else {
    }
    return
  }
  func.func @transform_0(%arg0: i32) -> (i32, i32) {
    %c0_i32 = arith.constant 0 : i32
    %c0_i32_0 = arith.constant 0 : i32
    return %arg0, %c0_i32 : i32, i32
  }
  func.func @transform_1(%arg0: i32) -> (i32, i32) {
    %c0_i32 = arith.constant 0 : i32
    %c0_i32_0 = arith.constant 0 : i32
    %c0_i32_1 = arith.constant 0 : i32
    return %c0_i32, %c0_i32_0 : i32, i32
  }
  func.func @transform_2(%arg0: i32) -> (i32, i32) {
    %c0_i32 = arith.constant 0 : i32
    %c0_i32_0 = arith.constant 0 : i32
    %c0_i32_1 = arith.constant 0 : i32
    return %c0_i32, %c0_i32_0 : i32, i32
  }
  func.func @transform_3(%arg0: i32) -> (i32, i32, i32) {
    %c0_i32 = arith.constant 0 : i32
    %c0_i32_0 = arith.constant 0 : i32
    %c0_i32_1 = arith.constant 0 : i32
    return %arg0, %c0_i32, %c0_i32_0 : i32, i32, i32
  }
  func.func @transform_4(%arg0: i32) -> (i32, i32, i32) {
    %c0_i32 = arith.constant 0 : i32
    %c0_i32_0 = arith.constant 0 : i32
    %c0_i32_1 = arith.constant 0 : i32
    return %arg0, %c0_i32, %c0_i32_0 : i32, i32, i32
  }
}

module attributes {stable_mosaic.version = 11 : i64} {
  func.func @kernel(%arg0: i32, %arg1: memref<16x128xf32, #tpu.memory_space<vmem>>, %arg2: memref<128x128xbf16, #tpu.memory_space<vmem>>, %arg3: memref<1x128xf32, #tpu.memory_space<vmem>>, %arg4: memref<1x128xf32, #tpu.memory_space<vmem>>, %arg5: memref<128x128xbf16, #tpu.memory_space<vmem>>, %arg6: memref<1x128xf32, #tpu.memory_space<vmem>>, %arg7: memref<16x128xf32, #tpu.memory_space<vmem>>) attributes {dimension_semantics = [#tpu.dimension_semantics<parallel>], iteration_bounds = array<i64: 2>, scalar_prefetch = 0 : i64, scratch_operands = 0 : i64, tpu.core_type = #tpu.core_type<tc>, window_params = [{transform_indices = @transform_0, window_bounds = array<i64: 16, 128>}, {pipeline_mode = #tpu.pipeline_mode<synchronous>, transform_indices = @transform_1, window_bounds = array<i64: 128, 128>}, {pipeline_mode = #tpu.pipeline_mode<synchronous>, transform_indices = @transform_2, window_bounds = array<i64: 1, 128>}, {pipeline_mode = #tpu.pipeline_mode<synchronous>, transform_indices = @transform_3, window_bounds = array<i64: 1, 128>}, {pipeline_mode = #tpu.pipeline_mode<synchronous>, transform_indices = @transform_4, window_bounds = array<i64: 128, 128>}, {pipeline_mode = #tpu.pipeline_mode<synchronous>, transform_indices = @transform_5, window_bounds = array<i64: 1, 128>}, {transform_indices = @transform_6, window_bounds = array<i64: 16, 128>}]} {
    %c0 = arith.constant 0 : index
    %c0_0 = arith.constant 0 : index
    %0 = vector.load %arg1[%c0, %c0_0] : memref<16x128xf32, #tpu.memory_space<vmem>>, vector<16x128xf32>
    %1 = arith.truncf %0 : vector<16x128xf32> to vector<16x128xbf16>
    %c0_1 = arith.constant 0 : index
    %c0_2 = arith.constant 0 : index
    %2 = vector.load %arg2[%c0_1, %c0_2] : memref<128x128xbf16, #tpu.memory_space<vmem>>, vector<128x128xbf16>
    %cst = arith.constant dense<0.000000e+00> : vector<16x128xf32>
    %3 = tpu.matmul %1, %2, %cst {dimension_numbers = #tpu.dot_dimension_numbers<[1], [0], [0], [1], [0, 0, 1, 1], [], []>} : vector<16x128xbf16>, vector<128x128xbf16>, vector<16x128xf32> -> vector<16x128xf32>
    %c0_3 = arith.constant 0 : index
    %c0_4 = arith.constant 0 : index
    %4 = vector.load %arg3[%c0_3, %c0_4] : memref<1x128xf32, #tpu.memory_space<vmem>>, vector<1x128xf32>
    %5 = vector.broadcast %4 : vector<1x128xf32> to vector<16x128xf32>
    %6 = arith.addf %3, %5 : vector<16x128xf32>
    %cst_5 = arith.constant 0.000000e+00 : f32
    %7 = vector.broadcast %cst_5 : f32 to vector<16x128xf32>
    %8 = arith.maximumf %6, %7 : vector<16x128xf32>
    %c0_6 = arith.constant 0 : index
    %c0_7 = arith.constant 0 : index
    %9 = vector.load %arg4[%c0_6, %c0_7] : memref<1x128xf32, #tpu.memory_space<vmem>>, vector<1x128xf32>
    %10 = vector.broadcast %9 : vector<1x128xf32> to vector<16x128xf32>
    %11 = arith.mulf %8, %10 : vector<16x128xf32>
    %12 = arith.truncf %11 : vector<16x128xf32> to vector<16x128xbf16>
    %c0_8 = arith.constant 0 : index
    %c0_9 = arith.constant 0 : index
    %13 = vector.load %arg5[%c0_8, %c0_9] : memref<128x128xbf16, #tpu.memory_space<vmem>>, vector<128x128xbf16>
    %cst_10 = arith.constant dense<0.000000e+00> : vector<16x128xf32>
    %14 = tpu.matmul %12, %13, %cst_10 {dimension_numbers = #tpu.dot_dimension_numbers<[1], [0], [0], [1], [0, 0, 1, 1], [], []>} : vector<16x128xbf16>, vector<128x128xbf16>, vector<16x128xf32> -> vector<16x128xf32>
    %c0_11 = arith.constant 0 : index
    %c0_12 = arith.constant 0 : index
    %15 = vector.load %arg6[%c0_11, %c0_12] : memref<1x128xf32, #tpu.memory_space<vmem>>, vector<1x128xf32>
    %16 = vector.broadcast %15 : vector<1x128xf32> to vector<16x128xf32>
    %17 = arith.addf %14, %16 : vector<16x128xf32>
    %c0_13 = arith.constant 0 : index
    %c0_14 = arith.constant 0 : index
    %18 = vector.load %arg7[%c0_13, %c0_14] : memref<16x128xf32, #tpu.memory_space<vmem>>, vector<16x128xf32>
    tpu.vector_store %arg7[%c0_13, %c0_14], %17 {strides = array<i32>} : memref<16x128xf32, #tpu.memory_space<vmem>>, vector<16x128xf32>,
    return
  }
  func.func @transform_0(%arg0: i32) -> (i32, i32) {
    %c0_i32 = arith.constant 0 : i32
    %c0_i32_0 = arith.constant 0 : i32
    return %arg0, %c0_i32 : i32, i32
  }
  func.func @transform_1(%arg0: i32) -> (i32, i32) {
    %c0_i32 = arith.constant 0 : i32
    %c0_i32_0 = arith.constant 0 : i32
    %c0_i32_1 = arith.constant 0 : i32
    return %c0_i32, %c0_i32_0 : i32, i32
  }
  func.func @transform_2(%arg0: i32) -> (i32, i32) {
    %c0_i32 = arith.constant 0 : i32
    %c0_i32_0 = arith.constant 0 : i32
    %c0_i32_1 = arith.constant 0 : i32
    return %c0_i32, %c0_i32_0 : i32, i32
  }
  func.func @transform_3(%arg0: i32) -> (i32, i32) {
    %c0_i32 = arith.constant 0 : i32
    %c0_i32_0 = arith.constant 0 : i32
    %c0_i32_1 = arith.constant 0 : i32
    return %c0_i32, %c0_i32_0 : i32, i32
  }
  func.func @transform_4(%arg0: i32) -> (i32, i32) {
    %c0_i32 = arith.constant 0 : i32
    %c0_i32_0 = arith.constant 0 : i32
    %c0_i32_1 = arith.constant 0 : i32
    return %c0_i32, %c0_i32_0 : i32, i32
  }
  func.func @transform_5(%arg0: i32) -> (i32, i32) {
    %c0_i32 = arith.constant 0 : i32
    %c0_i32_0 = arith.constant 0 : i32
    %c0_i32_1 = arith.constant 0 : i32
    return %c0_i32, %c0_i32_0 : i32, i32
  }
  func.func @transform_6(%arg0: i32) -> (i32, i32) {
    %c0_i32 = arith.constant 0 : i32
    %c0_i32_0 = arith.constant 0 : i32
    return %arg0, %c0_i32 : i32, i32
  }
}

</mosaic_0001>

<llo_original>
// kernel: ffn_forward.2
$region0: #{ffn_forward.2}
  #allocation0 [shape = 'u32[]', space=smem, size = 0x4, offset = 0x4, fixed_abs, tag = 'smem constant byte address 0x4 - core index']
  #allocation1 [shape = 'u32[72,128]{1,0:T(1,128)}', space=vmem, size = 0x9000, scoped, tag = 'internal scratch']
  %s0 = inlined_call_operand.vmem [shape: f32[32,128], index: 0, kind: input, shape index: {}]
  %s1 = inlined_call_operand.vmem [shape: bf16[128,128], index: 1, kind: input, shape index: {}]
  %s2 = inlined_call_operand.vmem [shape: f32[1,128], index: 2, kind: input, shape index: {}]
  %s3 = inlined_call_operand.vmem [shape: f32[2,8,128], index: 3, kind: output, shape index: {0}]
  %s4 = inlined_call_operand.vmem [shape: f32[2,8,128], index: 4, kind: output, shape index: {1}]
  %5 = xla_tuple %s3, %s4
  %s6 = sld [smem:[#allocation0]]
  $region61: #{ffn_forward.2} parent=0
    _
  %s8 = ssub.s32 1, %s6
  %s9 = scalar_select 0, %s8, %s6
  loop: start=0, step=1, limit=4
  $region2: #{ffn_forward.2} parent=0 // loop_pre_header
    _
  $region3: #{ffn_forward.2} parent=0 // loop_header
    %s11 = sphi 0, %s15
    %p12 = scmp.ge.s32.totalorder %s11, 4
    %s21 = sphi 0, %s23
    %s24 = sphi 0, %s21
    %s25 = sphi 0, %s24
    %s41 = sphi 0, %s25
    %s45 = sphi 0, %s45
    %s47 = sphi 0, %s45
    %s48 = sphi 0, %s47
    %s62 = sphi 0, %s48
    %s66 = sphi 0, %s66
    %s68 = sphi 0, %s66
    %s69 = sphi 0, %s68
    %s83 = sphi 0, %s69
    %s89 = sphi 0, %s91
    %s92 = sphi 0, %s89
    %s93 = sphi 0, %s92
    %s109 = sphi 0, %s93
    %s115 = sphi 0, %s117
    %s118 = sphi 0, %s115
    %s119 = sphi 0, %s118
    %s135 = sphi 0, %s119
  $region4: #{ffn_forward.2} parent=0 // loop_header_branch
    %14 = sbr.rel (%p12) target = $region8
  $region5: #{ffn_forward.2} parent=0 // loop_body
    %s16 = ssub.s32 %s11, 1
    %s17 = ssub.s32 %s11, 2
    %s18 = sadd.s32 %s11, 1
    %s19 = ssub.s32 %s11, %s18
    %p20 = scmp.eq.s32.totalorder %s19, 0
    %s22 = sadd.s32 %s21, 1
    %s23 = scalar_select %p20, %s21, %s22
    %p26 = pneg %p20
    %p27 = scmp.eq.s32.totalorder %s11, 1
    %p28 = por %p26, %p27
    %p29 = scmp.ne.s32.totalorder %s21, %s24
    %p30 = scmp.eq.s32.totalorder %s11, 0
    %p31 = por %p29, %p30
    %p32 = scmp.ne.s32.totalorder %s21, %s24
    %p33 = scmp.eq.s32.totalorder %s16, 1
    %p34 = por %p32, %p33
    %p35 = scmp.ne.s32.totalorder %s24, %s25
    %p36 = scmp.eq.s32.totalorder %s16, 0
    %p37 = por %p35, %p36
    %p38 = scmp.ne.s32.totalorder %s24, %s25
    %p39 = scmp.eq.s32.totalorder %s17, 1
    %p40 = por %p38, %p39
    %p42 = scmp.ne.s32.totalorder %s25, %s41
    %p43 = scmp.eq.s32.totalorder %s17, 0
    %p44 = por %p42, %p43
    %s46 = sadd.s32 %s45, 1
    %p49 = scmp.eq.s32.totalorder %s11, 1
    %p50 = scmp.ne.s32.totalorder %s45, %s47
    %p51 = scmp.eq.s32.totalorder %s11, 0
    %p52 = por %p50, %p51
    %p53 = scmp.ne.s32.totalorder %s45, %s47
    %p54 = scmp.eq.s32.totalorder %s16, 1
    %p55 = por %p53, %p54
    %p56 = scmp.ne.s32.totalorder %s47, %s48
    %p57 = scmp.eq.s32.totalorder %s16, 0
    %p58 = por %p56, %p57
    %p59 = scmp.ne.s32.totalorder %s47, %s48
    %p60 = scmp.eq.s32.totalorder %s17, 1
    %p61 = por %p59, %p60
    %p63 = scmp.ne.s32.totalorder %s48, %s62
    %p64 = scmp.eq.s32.totalorder %s17, 0
    %p65 = por %p63, %p64
    %s67 = sadd.s32 %s66, 1
    %p70 = scmp.eq.s32.totalorder %s11, 1
    %p71 = scmp.ne.s32.totalorder %s66, %s68
    %p72 = scmp.eq.s32.totalorder %s11, 0
    %p73 = por %p71, %p72
    %p74 = scmp.ne.s32.totalorder %s66, %s68
    %p75 = scmp.eq.s32.totalorder %s16, 1
    %p76 = por %p74, %p75
    %p77 = scmp.ne.s32.totalorder %s68, %s69
    %p78 = scmp.eq.s32.totalorder %s16, 0
    %p79 = por %p77, %p78
    %p80 = scmp.ne.s32.totalorder %s68, %s69
    %p81 = scmp.eq.s32.totalorder %s17, 1
    %p82 = por %p80, %p81
    %p84 = scmp.ne.s32.totalorder %s69, %s83
    %p85 = scmp.eq.s32.totalorder %s17, 0
    %p86 = por %p84, %p85
    %s87 = ssub.s32 %s11, %s18
    %p88 = scmp.eq.s32.totalorder %s87, 0
    %s90 = sadd.s32 %s89, 1
    %s91 = scalar_select %p88, %s89, %s90
    %p94 = pneg %p88
    %p95 = scmp.eq.s32.totalorder %s11, 1
    %p96 = por %p94, %p95
    %p97 = scmp.ne.s32.totalorder %s89, %s92
    %p98 = scmp.eq.s32.totalorder %s11, 0
    %p99 = por %p97, %p98
    %p100 = scmp.ne.s32.totalorder %s89, %s92
    %p101 = scmp.eq.s32.totalorder %s16, 1
    %p102 = por %p100, %p101
    %p103 = scmp.ne.s32.totalorder %s92, %s93
    %p104 = scmp.eq.s32.totalorder %s16, 0
    %p105 = por %p103, %p104
    %p106 = scmp.ne.s32.totalorder %s92, %s93
    %p107 = scmp.eq.s32.totalorder %s17, 1
    %p108 = por %p106, %p107
    %p110 = scmp.ne.s32.totalorder %s93, %s109
    %p111 = scmp.eq.s32.totalorder %s17, 0
    %p112 = por %p110, %p111
    %s113 = ssub.s32 %s11, %s18
    %p114 = scmp.eq.s32.totalorder %s113, 0
    %s116 = sadd.s32 %s115, 1
    %s117 = scalar_select %p114, %s115, %s116
    %p120 = pneg %p114
    %p121 = scmp.eq.s32.totalorder %s11, 1
    %p122 = por %p120, %p121
    %p123 = scmp.ne.s32.totalorder %s115, %s118
    %p124 = scmp.eq.s32.totalorder %s11, 0
    %p125 = por %p123, %p124
    %p126 = scmp.ne.s32.totalorder %s115, %s118
    %p127 = scmp.eq.s32.totalorder %s16, 1
    %p128 = por %p126, %p127
    %p129 = scmp.ne.s32.totalorder %s118, %s119
    %p130 = scmp.eq.s32.totalorder %s16, 0
    %p131 = por %p129, %p130
    %p132 = scmp.ne.s32.totalorder %s118, %s119
    %p133 = scmp.eq.s32.totalorder %s17, 1
    %p134 = por %p132, %p133
    %p136 = scmp.ne.s32.totalorder %s119, %s135
    %p137 = scmp.eq.s32.totalorder %s17, 0
    %p138 = por %p136, %p137
    %p139 = scmp.le.s32.totalorder 1, %s11
    %p140 = scmp.lt.s32.totalorder %s11, 3
    %p141 = pnand %p139, %p140
    %p142 = pneg %p141
    // Predicated region
    $region9: #{ffn_forward.2} parent=5 // pred_check
      _
    $region10: #{ffn_forward.2} parent=5 // pred_check_branch
      %144 = sbr.rel (%p141) target = $region12
    $region11: #{ffn_forward.2} parent=5 // pred_region
      %s145 = ssub.s32 %s11, 1
      // Predicated region
      $region13: #{ffn_forward.2} parent=11 // pred_check
        %p146 = pneg %p58
      $region14: #{ffn_forward.2} parent=11 // pred_check_branch
        %148 = sbr.rel (%p146) target = $region16
      $region15: #{ffn_forward.2} parent=11 // pred_region
        _
      $region16: #{ffn_forward.2} parent=11 // pred_fallthru
        _
      // Predicated region
      $region17: #{ffn_forward.2} parent=11 // pred_check
        %p149 = pneg %p79
      $region18: #{ffn_forward.2} parent=11 // pred_check_branch
        %151 = sbr.rel (%p149) target = $region20
      $region19: #{ffn_forward.2} parent=11 // pred_region
        _
      $region20: #{ffn_forward.2} parent=11 // pred_fallthru
        _
    $region12: #{ffn_forward.2} parent=5 // pred_fallthru
      _
    %p152 = scmp.lt.s32.totalorder %s11, 2
    // Predicated region
    $region21: #{ffn_forward.2} parent=5 // pred_check
      %p153 = pneg %p152
    $region22: #{ffn_forward.2} parent=5 // pred_check_branch
      %155 = sbr.rel (%p153) target = $region24
    $region23: #{ffn_forward.2} parent=5 // pred_region
      // Predicated region
      $region25: #{ffn_forward.2} parent=23 // pred_check
        %p156 = pneg %p31
      $region26: #{ffn_forward.2} parent=23 // pred_check_branch
        %158 = sbr.rel (%p156) target = $region28
      $region27: #{ffn_forward.2} parent=23 // pred_region
        %s159 = smul.u32 2, %s11
        %p160 = scmp.lt.s32.totalorder %s159, 3
        %s161 = scalar_select %p160, %s159, 3
        %s162 = smul.addr %s161, 8
        %s163 = scalar_lea.vmem %s0, %s162
        %s164 = smul.u32 2, %s11
      $region28: #{ffn_forward.2} parent=23 // pred_fallthru
        _
    $region24: #{ffn_forward.2} parent=5 // pred_fallthru
      _
    %p165 = scmp.le.s32.totalorder 1, %s11
    %p166 = scmp.lt.s32.totalorder %s11, 3
    %p167 = pnand %p165, %p166
    %p168 = pneg %p167
    // Predicated region
    $region29: #{ffn_forward.2} parent=5 // pred_check
      _
    $region30: #{ffn_forward.2} parent=5 // pred_check_branch
      %170 = sbr.rel (%p167) target = $region32
    $region31: #{ffn_forward.2} parent=5 // pred_region
      %s171 = ssub.s32 %s11, 1
      %s172 = smul.u32 2, %s16
      %p173 = scmp.lt.s32.totalorder %s172, 3
      %s174 = scalar_select %p173, %s172, 3
      %s175 = smul.addr %s174, 8
      %s176 = scalar_lea.vmem %s0, %s175
      %p177 = pneg %p37
      %p178 = pneg %p34
      %p179 = pneg %p58
      %p180 = pneg %p55
      %p181 = pneg %p79
      %p182 = pneg %p76
      %p183 = pneg %p105
      %p184 = pneg %p102
      %p185 = scmp.lt.s32.totalorder %s16, 1
      %s186 = scalar_select %p185, %s16, 1
      %s187 = smul.addr %s186, 8
      %s188 = scalar_lea.vmem %s3, %s187
      %p189 = pneg %p131
      %p190 = pneg %p128
      %p191 = scmp.lt.s32.totalorder %s16, 1
      %s192 = scalar_select %p191, %s16, 1
      %s193 = smul.addr %s192, 8
      %s194 = scalar_lea.vmem %s4, %s193
      %s195 = smul.u32 2, %s16
      %p196 = scmp.lt.s32.totalorder %s195, 3
      %s197 = scalar_select %p196, %s195, 3
      %s198 = smul.addr %s197, 8
      %s199 = scalar_lea.vmem %s0, %s198
      %s200 = smul.u32 2, %s16
      %p201 = scmp.lt.s32.totalorder %s16, 1
      %s202 = scalar_select %p201, %s16, 1
      %s203 = smul.addr %s202, 8
      %s204 = scalar_lea.vmem %s3, %s203
      %p205 = scmp.lt.s32.totalorder %s16, 1
      %s206 = scalar_select %p205, %s16, 1
      %s207 = smul.addr %s206, 8
      %s208 = scalar_lea.vmem %s4, %s207
      %v209 = vld [vmem:[%s199] sm:$0xff]
      %v210 = vld [vmem:[%s199 + $0x8] sm:$0xff]
      %v211 = vpack.c.bf16 %v210, %v209
      %v212 = vld [vmem:[%s1] sm:$0xf]
      %v213 = vld [vmem:[%s1 + $0x4] sm:$0xf]
      %v214 = vld [vmem:[%s1 + $0x8] sm:$0xf]
      %v215 = vld [vmem:[%s1 + $0xc] sm:$0xf]
      %v216 = vld [vmem:[%s1 + $0x10] sm:$0xf]
      %v217 = vld [vmem:[%s1 + $0x14] sm:$0xf]
      %v218 = vld [vmem:[%s1 + $0x18] sm:$0xf]
      %v219 = vld [vmem:[%s1 + $0x1c] sm:$0xf]
      %v220 = vld [vmem:[%s1 + $0x20] sm:$0xf]
      %v221 = vld [vmem:[%s1 + $0x24] sm:$0xf]
      %v222 = vld [vmem:[%s1 + $0x28] sm:$0xf]
      %v223 = vld [vmem:[%s1 + $0x2c] sm:$0xf]
      %v224 = vld [vmem:[%s1 + $0x30] sm:$0xf]
      %v225 = vld [vmem:[%s1 + $0x34] sm:$0xf]
      %v226 = vld [vmem:[%s1 + $0x38] sm:$0xf]
      %v227 = vld [vmem:[%s1 + $0x3c] sm:$0xf]
      %v228 = vld [vmem:[%s2] sm:$0x1]
      %v230 = vperm.slane %v228, 0
      %v248 = vunpack.c.l.b16 %v212
      %v249 = vunpack.c.l.b16 %v213
      %v250 = vunpack.c.l.b16 %v214
      %v251 = vunpack.c.l.b16 %v215
      %v252 = vunpack.c.l.b16 %v216
      %v253 = vunpack.c.l.b16 %v217
      %v254 = vunpack.c.l.b16 %v218
      %v255 = vunpack.c.l.b16 %v219
      %v256 = vunpack.c.l.b16 %v220
      %v257 = vunpack.c.l.b16 %v221
      %v258 = vunpack.c.l.b16 %v222
      %v259 = vunpack.c.l.b16 %v223
      %v260 = vunpack.c.l.b16 %v224
      %v261 = vunpack.c.l.b16 %v225
      %v262 = vunpack.c.l.b16 %v226
      %v263 = vunpack.c.l.b16 %v227
      %v264 = vpack.c.b16 %v249, %v248
      %v265 = vpack.c.b16 %v251, %v250
      %v266 = vpack.c.b16 %v253, %v252
      %v267 = vpack.c.b16 %v255, %v254
      %v268 = vpack.c.b16 %v257, %v256
      %v269 = vpack.c.b16 %v259, %v258
      %v270 = vpack.c.b16 %v261, %v260
      %v271 = vpack.c.b16 %v263, %v262
      %280 = vmatpush.bf16.msra.mxu0 %v271
      %281 = vmatpush.bf16.msra.mxu0 %v270
      %282 = vmatpush.bf16.msra.mxu0 %v269
      %283 = vmatpush.bf16.msra.mxu0 %v268
      %284 = vmatpush.bf16.msra.mxu0 %v267
      %285 = vmatpush.bf16.msra.mxu0 %v266
      %286 = vmatpush.bf16.msra.mxu0 %v265
      %287 = vmatpush.bf16.msra.mxu0 %v264
      %288 = vmatmul.bf16.gmra.mxu0 %v211
      %v289 = vpop.f32.mrf.mxu0
      %v290 = vadd.f32 %v230, %v289
      %v291 = vpop.f32.mrf.mxu0
      %v292 = vadd.f32 %v230, %v291
      %293 = vdwg.mxu0
      %v294 = vmax.f32 %v290, 0.0
      %v295 = vmax.f32 %v292, 0.0
      %p296 = scmp.eq.s32.totalorder %s16, 1
      // Predicated region
      $region33: #{ffn_forward.2} parent=31 // pred_check
        %p297 = pneg %p296
      $region34: #{ffn_forward.2} parent=31 // pred_check_branch
        %299 = sbr.rel (%p297) target = $region36
      $region35: #{ffn_forward.2} parent=31 // pred_region
        %v300 = vlaneseq
        %v301 = vshrl.u32 %v300, 7
        %v302 = vadd.s32 %v301, 8
        %v303 = vadd.s32 %v301, 16
        %v304 = vadd.s32 %v302, 16
        %vm305 = vcmp.lt.s32.totalorder %v303, 18
        %vm306 = vcmp.lt.s32.totalorder %v304, 18
        %v307 = vsel %vm305, 1, 0
        %v308 = vsel %vm306, 1, 0
        %vm309 = vcmp.eq.s32.totalorder %v307, 1
        %vm310 = vcmp.eq.s32.totalorder %v308, 1
        %v311 = vsel %vm309, %v294, 0.0
        %v312 = vsel %vm310, %v295, 0.0
        %v313 = vadd.f32 %v311, %v312
        %v314 = vrot.slane %v313, 4
        %v315 = vadd.f32 %v313, %v314
        %v316 = vrot.slane %v315, 2
        %v317 = vadd.f32 %v315, %v316
        %v318 = vrot.slane %v317, 1
        %v319 = vadd.f32 %v317, %v318
        %v320 = vmul.f32 %v311, %v311
        %v321 = vmul.f32 %v312, %v312
        %v322 = vadd.f32 %v320, %v321
        %v323 = vrot.slane %v322, 4
        %v324 = vadd.f32 %v322, %v323
        %v325 = vrot.slane %v324, 2
        %v326 = vadd.f32 %v324, %v325
        %v327 = vrot.slane %v326, 1
        %v328 = vadd.f32 %v326, %v327
        %329 = vst [vmem:[%s204] sm:$0xff] %v319
        %330 = vst [vmem:[%s208] sm:$0xff] %v328
      $region36: #{ffn_forward.2} parent=31 // pred_fallthru
        _
      %p331 = scmp.ne.s32.totalorder %s16, 1
      // Predicated region
      $region37: #{ffn_forward.2} parent=31 // pred_check
        %p332 = pneg %p331
      $region38: #{ffn_forward.2} parent=31 // pred_check_branch
        %334 = sbr.rel (%p332) target = $region40
      $region39: #{ffn_forward.2} parent=31 // pred_region
        %v335 = vadd.f32 %v294, %v295
        %v336 = vrot.slane %v335, 4
        %v337 = vadd.f32 %v335, %v336
        %v338 = vrot.slane %v337, 2
        %v339 = vadd.f32 %v337, %v338
        %v340 = vrot.slane %v339, 1
        %v341 = vadd.f32 %v339, %v340
        %v342 = vmul.f32 %v294, %v294
        %v343 = vmul.f32 %v295, %v295
        %v344 = vadd.f32 %v342, %v343
        %v345 = vrot.slane %v344, 4
        %v346 = vadd.f32 %v344, %v345
        %v347 = vrot.slane %v346, 2
        %v348 = vadd.f32 %v346, %v347
        %v349 = vrot.slane %v348, 1
        %v350 = vadd.f32 %v348, %v349
        %351 = vst [vmem:[%s204] sm:$0xff] %v341
        %352 = vst [vmem:[%s208] sm:$0xff] %v350
      $region40: #{ffn_forward.2} parent=31 // pred_fallthru
        _
      %p353 = scmp.lt.s32.totalorder %s16, 1
      %s354 = scalar_select %p353, %s16, 1
      %s355 = smul.addr %s354, 8
      %s356 = scalar_lea.vmem %s3, %s355
      %p357 = scmp.lt.s32.totalorder %s16, 1
      %s358 = scalar_select %p357, %s16, 1
      %s359 = smul.addr %s358, 8
      %s360 = scalar_lea.vmem %s4, %s359
      // Predicated region
      $region41: #{ffn_forward.2} parent=31 // pred_check
        %p361 = pneg %p102
      $region42: #{ffn_forward.2} parent=31 // pred_check_branch
        %363 = sbr.rel (%p361) target = $region44
      $region43: #{ffn_forward.2} parent=31 // pred_region
        _
      $region44: #{ffn_forward.2} parent=31 // pred_fallthru
        _
      // Predicated region
      $region45: #{ffn_forward.2} parent=31 // pred_check
        %p364 = pneg %p128
      $region46: #{ffn_forward.2} parent=31 // pred_check_branch
        %366 = sbr.rel (%p364) target = $region48
      $region47: #{ffn_forward.2} parent=31 // pred_region
        _
      $region48: #{ffn_forward.2} parent=31 // pred_fallthru
        _
    $region32: #{ffn_forward.2} parent=5 // pred_fallthru
      _
    %p367 = scmp.le.s32.totalorder 2, %s11
    // Predicated region
    $region49: #{ffn_forward.2} parent=5 // pred_check
      %p368 = pneg %p367
    $region50: #{ffn_forward.2} parent=5 // pred_check_branch
      %370 = sbr.rel (%p368) target = $region52
    $region51: #{ffn_forward.2} parent=5 // pred_region
      %s371 = ssub.s32 %s11, 2
      // Predicated region
      $region53: #{ffn_forward.2} parent=51 // pred_check
        %p372 = pneg %p108
      $region54: #{ffn_forward.2} parent=51 // pred_check_branch
        %374 = sbr.rel (%p372) target = $region56
      $region55: #{ffn_forward.2} parent=51 // pred_region
        %p375 = scmp.lt.s32.totalorder %s17, 1
        %s376 = scalar_select %p375, %s17, 1
        %s377 = smul.addr %s376, 8
        %s378 = scalar_lea.vmem %s3, %s377
      $region56: #{ffn_forward.2} parent=51 // pred_fallthru
        _
      // Predicated region
      $region57: #{ffn_forward.2} parent=51 // pred_check
        %p379 = pneg %p134
      $region58: #{ffn_forward.2} parent=51 // pred_check_branch
        %381 = sbr.rel (%p379) target = $region60
      $region59: #{ffn_forward.2} parent=51 // pred_region
        %p382 = scmp.lt.s32.totalorder %s17, 1
        %s383 = scalar_select %p382, %s17, 1
        %s384 = smul.addr %s383, 8
        %s385 = scalar_lea.vmem %s4, %s384
      $region60: #{ffn_forward.2} parent=51 // pred_fallthru
        _
    $region52: #{ffn_forward.2} parent=5 // pred_fallthru
      _
  $region6: #{ffn_forward.2} parent=0 // loop_footer
    %s15 = sadd.s32 1, %s11
  $region7: #{ffn_forward.2} parent=0 // loop_footer_branch
    %10 = sbr.rel target = $region3
  $region8: #{ffn_forward.2} parent=0 // loop_exit
    _

// kernel: ffn_forward.3
$region0: #{ffn_forward.3}
  #allocation0 [shape = 'u32[]', space=smem, size = 0x4, offset = 0x4, fixed_abs, tag = 'smem constant byte address 0x4 - core index']
  #allocation1 [shape = 'u32[72,128]{1,0:T(1,128)}', space=vmem, size = 0x9000, scoped, tag = 'internal scratch']
  %s0 = inlined_call_operand.vmem [shape: f32[32,128], index: 0, kind: input, shape index: {}]
  %s1 = inlined_call_operand.vmem [shape: bf16[128,128], index: 1, kind: input, shape index: {}]
  %s2 = inlined_call_operand.vmem [shape: f32[1,128], index: 2, kind: input, shape index: {}]
  %s3 = inlined_call_operand.vmem [shape: f32[1,128], index: 3, kind: input, shape index: {}]
  %s4 = inlined_call_operand.vmem [shape: bf16[128,128], index: 4, kind: input, shape index: {}]
  %s5 = inlined_call_operand.vmem [shape: f32[1,128], index: 5, kind: input, shape index: {}]
  %s6 = inlined_call_operand.vmem [shape: f32[32,128], index: 6, kind: output, shape index: {}]
  %s7 = sld [smem:[#allocation0]]
  $region57: #{ffn_forward.3} parent=0
    _
  %s9 = ssub.s32 1, %s7
  %s10 = scalar_select 0, %s9, %s7
  loop: start=0, step=1, limit=4
  $region2: #{ffn_forward.3} parent=0 // loop_pre_header
    _
  $region3: #{ffn_forward.3} parent=0 // loop_header
    %s12 = sphi 0, %s16
    %p13 = scmp.ge.s32.totalorder %s12, 4
    %s22 = sphi 0, %s24
    %s25 = sphi 0, %s22
    %s26 = sphi 0, %s25
    %s42 = sphi 0, %s26
    %s46 = sphi 0, %s46
    %s48 = sphi 0, %s46
    %s49 = sphi 0, %s48
    %s63 = sphi 0, %s49
    %s67 = sphi 0, %s67
    %s69 = sphi 0, %s67
    %s70 = sphi 0, %s69
    %s84 = sphi 0, %s70
    %s88 = sphi 0, %s88
    %s90 = sphi 0, %s88
    %s91 = sphi 0, %s90
    %s105 = sphi 0, %s91
    %s109 = sphi 0, %s109
    %s111 = sphi 0, %s109
    %s112 = sphi 0, %s111
    %s126 = sphi 0, %s112
    %s130 = sphi 0, %s130
    %s132 = sphi 0, %s130
    %s133 = sphi 0, %s132
    %s147 = sphi 0, %s133
    %s153 = sphi 0, %s155
    %s156 = sphi 0, %s153
    %s157 = sphi 0, %s156
    %s173 = sphi 0, %s157
  $region4: #{ffn_forward.3} parent=0 // loop_header_branch
    %15 = sbr.rel (%p13) target = $region8
  $region5: #{ffn_forward.3} parent=0 // loop_body
    %s17 = ssub.s32 %s12, 1
    %s18 = ssub.s32 %s12, 2
    %s19 = sadd.s32 %s12, 1
    %s20 = ssub.s32 %s12, %s19
    %p21 = scmp.eq.s32.totalorder %s20, 0
    %s23 = sadd.s32 %s22, 1
    %s24 = scalar_select %p21, %s22, %s23
    %p27 = pneg %p21
    %p28 = scmp.eq.s32.totalorder %s12, 1
    %p29 = por %p27, %p28
    %p30 = scmp.ne.s32.totalorder %s22, %s25
    %p31 = scmp.eq.s32.totalorder %s12, 0
    %p32 = por %p30, %p31
    %p33 = scmp.ne.s32.totalorder %s22, %s25
    %p34 = scmp.eq.s32.totalorder %s17, 1
    %p35 = por %p33, %p34
    %p36 = scmp.ne.s32.totalorder %s25, %s26
    %p37 = scmp.eq.s32.totalorder %s17, 0
    %p38 = por %p36, %p37
    %p39 = scmp.ne.s32.totalorder %s25, %s26
    %p40 = scmp.eq.s32.totalorder %s18, 1
    %p41 = por %p39, %p40
    %p43 = scmp.ne.s32.totalorder %s26, %s42
    %p44 = scmp.eq.s32.totalorder %s18, 0
    %p45 = por %p43, %p44
    %s47 = sadd.s32 %s46, 1
    %p50 = scmp.eq.s32.totalorder %s12, 1
    %p51 = scmp.ne.s32.totalorder %s46, %s48
    %p52 = scmp.eq.s32.totalorder %s12, 0
    %p53 = por %p51, %p52
    %p54 = scmp.ne.s32.totalorder %s46, %s48
    %p55 = scmp.eq.s32.totalorder %s17, 1
    %p56 = por %p54, %p55
    %p57 = scmp.ne.s32.totalorder %s48, %s49
    %p58 = scmp.eq.s32.totalorder %s17, 0
    %p59 = por %p57, %p58
    %p60 = scmp.ne.s32.totalorder %s48, %s49
    %p61 = scmp.eq.s32.totalorder %s18, 1
    %p62 = por %p60, %p61
    %p64 = scmp.ne.s32.totalorder %s49, %s63
    %p65 = scmp.eq.s32.totalorder %s18, 0
    %p66 = por %p64, %p65
    %s68 = sadd.s32 %s67, 1
    %p71 = scmp.eq.s32.totalorder %s12, 1
    %p72 = scmp.ne.s32.totalorder %s67, %s69
    %p73 = scmp.eq.s32.totalorder %s12, 0
    %p74 = por %p72, %p73
    %p75 = scmp.ne.s32.totalorder %s67, %s69
    %p76 = scmp.eq.s32.totalorder %s17, 1
    %p77 = por %p75, %p76
    %p78 = scmp.ne.s32.totalorder %s69, %s70
    %p79 = scmp.eq.s32.totalorder %s17, 0
    %p80 = por %p78, %p79
    %p81 = scmp.ne.s32.totalorder %s69, %s70
    %p82 = scmp.eq.s32.totalorder %s18, 1
    %p83 = por %p81, %p82
    %p85 = scmp.ne.s32.totalorder %s70, %s84
    %p86 = scmp.eq.s32.totalorder %s18, 0
    %p87 = por %p85, %p86
    %s89 = sadd.s32 %s88, 1
    %p92 = scmp.eq.s32.totalorder %s12, 1
    %p93 = scmp.ne.s32.totalorder %s88, %s90
    %p94 = scmp.eq.s32.totalorder %s12, 0
    %p95 = por %p93, %p94
    %p96 = scmp.ne.s32.totalorder %s88, %s90
    %p97 = scmp.eq.s32.totalorder %s17, 1
    %p98 = por %p96, %p97
    %p99 = scmp.ne.s32.totalorder %s90, %s91
    %p100 = scmp.eq.s32.totalorder %s17, 0
    %p101 = por %p99, %p100
    %p102 = scmp.ne.s32.totalorder %s90, %s91
    %p103 = scmp.eq.s32.totalorder %s18, 1
    %p104 = por %p102, %p103
    %p106 = scmp.ne.s32.totalorder %s91, %s105
    %p107 = scmp.eq.s32.totalorder %s18, 0
    %p108 = por %p106, %p107
    %s110 = sadd.s32 %s109, 1
    %p113 = scmp.eq.s32.totalorder %s12, 1
    %p114 = scmp.ne.s32.totalorder %s109, %s111
    %p115 = scmp.eq.s32.totalorder %s12, 0
    %p116 = por %p114, %p115
    %p117 = scmp.ne.s32.totalorder %s109, %s111
    %p118 = scmp.eq.s32.totalorder %s17, 1
    %p119 = por %p117, %p118
    %p120 = scmp.ne.s32.totalorder %s111, %s112
    %p121 = scmp.eq.s32.totalorder %s17, 0
    %p122 = por %p120, %p121
    %p123 = scmp.ne.s32.totalorder %s111, %s112
    %p124 = scmp.eq.s32.totalorder %s18, 1
    %p125 = por %p123, %p124
    %p127 = scmp.ne.s32.totalorder %s112, %s126
    %p128 = scmp.eq.s32.totalorder %s18, 0
    %p129 = por %p127, %p128
    %s131 = sadd.s32 %s130, 1
    %p134 = scmp.eq.s32.totalorder %s12, 1
    %p135 = scmp.ne.s32.totalorder %s130, %s132
    %p136 = scmp.eq.s32.totalorder %s12, 0
    %p137 = por %p135, %p136
    %p138 = scmp.ne.s32.totalorder %s130, %s132
    %p139 = scmp.eq.s32.totalorder %s17, 1
    %p140 = por %p138, %p139
    %p141 = scmp.ne.s32.totalorder %s132, %s133
    %p142 = scmp.eq.s32.totalorder %s17, 0
    %p143 = por %p141, %p142
    %p144 = scmp.ne.s32.totalorder %s132, %s133
    %p145 = scmp.eq.s32.totalorder %s18, 1
    %p146 = por %p144, %p145
    %p148 = scmp.ne.s32.totalorder %s133, %s147
    %p149 = scmp.eq.s32.totalorder %s18, 0
    %p150 = por %p148, %p149
    %s151 = ssub.s32 %s12, %s19
    %p152 = scmp.eq.s32.totalorder %s151, 0
    %s154 = sadd.s32 %s153, 1
    %s155 = scalar_select %p152, %s153, %s154
    %p158 = pneg %p152
    %p159 = scmp.eq.s32.totalorder %s12, 1
    %p160 = por %p158, %p159
    %p161 = scmp.ne.s32.totalorder %s153, %s156
    %p162 = scmp.eq.s32.totalorder %s12, 0
    %p163 = por %p161, %p162
    %p164 = scmp.ne.s32.totalorder %s153, %s156
    %p165 = scmp.eq.s32.totalorder %s17, 1
    %p166 = por %p164, %p165
    %p167 = scmp.ne.s32.totalorder %s156, %s157
    %p168 = scmp.eq.s32.totalorder %s17, 0
    %p169 = por %p167, %p168
    %p170 = scmp.ne.s32.totalorder %s156, %s157
    %p171 = scmp.eq.s32.totalorder %s18, 1
    %p172 = por %p170, %p171
    %p174 = scmp.ne.s32.totalorder %s157, %s173
    %p175 = scmp.eq.s32.totalorder %s18, 0
    %p176 = por %p174, %p175
    %p177 = scmp.le.s32.totalorder 1, %s12
    %p178 = scmp.lt.s32.totalorder %s12, 3
    %p179 = pnand %p177, %p178
    %p180 = pneg %p179
    // Predicated region
    $region9: #{ffn_forward.3} parent=5 // pred_check
      _
    $region10: #{ffn_forward.3} parent=5 // pred_check_branch
      %182 = sbr.rel (%p179) target = $region12
    $region11: #{ffn_forward.3} parent=5 // pred_region
      %s183 = ssub.s32 %s12, 1
      // Predicated region
      $region13: #{ffn_forward.3} parent=11 // pred_check
        %p184 = pneg %p59
      $region14: #{ffn_forward.3} parent=11 // pred_check_branch
        %186 = sbr.rel (%p184) target = $region16
      $region15: #{ffn_forward.3} parent=11 // pred_region
        _
      $region16: #{ffn_forward.3} parent=11 // pred_fallthru
        _
      // Predicated region
      $region17: #{ffn_forward.3} parent=11 // pred_check
        %p187 = pneg %p80
      $region18: #{ffn_forward.3} parent=11 // pred_check_branch
        %189 = sbr.rel (%p187) target = $region20
      $region19: #{ffn_forward.3} parent=11 // pred_region
        _
      $region20: #{ffn_forward.3} parent=11 // pred_fallthru
        _
      // Predicated region
      $region21: #{ffn_forward.3} parent=11 // pred_check
        %p190 = pneg %p101
      $region22: #{ffn_forward.3} parent=11 // pred_check_branch
        %192 = sbr.rel (%p190) target = $region24
      $region23: #{ffn_forward.3} parent=11 // pred_region
        _
      $region24: #{ffn_forward.3} parent=11 // pred_fallthru
        _
      // Predicated region
      $region25: #{ffn_forward.3} parent=11 // pred_check
        %p193 = pneg %p122
      $region26: #{ffn_forward.3} parent=11 // pred_check_branch
        %195 = sbr.rel (%p193) target = $region28
      $region27: #{ffn_forward.3} parent=11 // pred_region
        _
      $region28: #{ffn_forward.3} parent=11 // pred_fallthru
        _
      // Predicated region
      $region29: #{ffn_forward.3} parent=11 // pred_check
        %p196 = pneg %p143
      $region30: #{ffn_forward.3} parent=11 // pred_check_branch
        %198 = sbr.rel (%p196) target = $region32
      $region31: #{ffn_forward.3} parent=11 // pred_region
        _
      $region32: #{ffn_forward.3} parent=11 // pred_fallthru
        _
    $region12: #{ffn_forward.3} parent=5 // pred_fallthru
      _
    %p199 = scmp.lt.s32.totalorder %s12, 2
    // Predicated region
    $region33: #{ffn_forward.3} parent=5 // pred_check
      %p200 = pneg %p199
    $region34: #{ffn_forward.3} parent=5 // pred_check_branch
      %202 = sbr.rel (%p200) target = $region36
    $region35: #{ffn_forward.3} parent=5 // pred_region
      // Predicated region
      $region37: #{ffn_forward.3} parent=35 // pred_check
        %p203 = pneg %p32
      $region38: #{ffn_forward.3} parent=35 // pred_check_branch
        %205 = sbr.rel (%p203) target = $region40
      $region39: #{ffn_forward.3} parent=35 // pred_region
        %s206 = smul.u32 2, %s12
        %p207 = scmp.lt.s32.totalorder %s206, 3
        %s208 = scalar_select %p207, %s206, 3
        %s209 = smul.addr %s208, 8
        %s210 = scalar_lea.vmem %s0, %s209
        %s211 = smul.u32 2, %s12
      $region40: #{ffn_forward.3} parent=35 // pred_fallthru
        _
    $region36: #{ffn_forward.3} parent=5 // pred_fallthru
      _
    %p212 = scmp.le.s32.totalorder 1, %s12
    %p213 = scmp.lt.s32.totalorder %s12, 3
    %p214 = pnand %p212, %p213
    %p215 = pneg %p214
    // Predicated region
    $region41: #{ffn_forward.3} parent=5 // pred_check
      _
    $region42: #{ffn_forward.3} parent=5 // pred_check_branch
      %217 = sbr.rel (%p214) target = $region44
    $region43: #{ffn_forward.3} parent=5 // pred_region
      %s218 = ssub.s32 %s12, 1
      %s219 = smul.u32 2, %s17
      %p220 = scmp.lt.s32.totalorder %s219, 3
      %s221 = scalar_select %p220, %s219, 3
      %s222 = smul.addr %s221, 8
      %s223 = scalar_lea.vmem %s0, %s222
      %p224 = pneg %p38
      %p225 = pneg %p35
      %p226 = pneg %p59
      %p227 = pneg %p56
      %p228 = pneg %p80
      %p229 = pneg %p77
      %p230 = pneg %p101
      %p231 = pneg %p98
      %p232 = pneg %p122
      %p233 = pneg %p119
      %p234 = pneg %p143
      %p235 = pneg %p140
      %p236 = pneg %p169
      %p237 = pneg %p166
      %s238 = smul.u32 2, %s17
      %p239 = scmp.lt.s32.totalorder %s238, 3
      %s240 = scalar_select %p239, %s238, 3
      %s241 = smul.addr %s240, 8
      %s242 = scalar_lea.vmem %s6, %s241
      %s243 = smul.u32 2, %s17
      %p244 = scmp.lt.s32.totalorder %s243, 3
      %s245 = scalar_select %p244, %s243, 3
      %s246 = smul.addr %s245, 8
      %s247 = scalar_lea.vmem %s0, %s246
      %s248 = smul.u32 2, %s17
      %s249 = smul.u32 2, %s17
      %p250 = scmp.lt.s32.totalorder %s249, 3
      %s251 = scalar_select %p250, %s249, 3
      %s252 = smul.addr %s251, 8
      %s253 = scalar_lea.vmem %s6, %s252
      %s254 = smul.u32 2, %s17
      %v255 = vld [vmem:[%s247] sm:$0xff]
      %v256 = vld [vmem:[%s247 + $0x8] sm:$0xff]
      %v257 = vpack.c.bf16 %v256, %v255
      %v258 = vld [vmem:[%s1] sm:$0xf]
      %v259 = vld [vmem:[%s1 + $0x4] sm:$0xf]
      %v260 = vld [vmem:[%s1 + $0x8] sm:$0xf]
      %v261 = vld [vmem:[%s1 + $0xc] sm:$0xf]
      %v262 = vld [vmem:[%s1 + $0x10] sm:$0xf]
      %v263 = vld [vmem:[%s1 + $0x14] sm:$0xf]
      %v264 = vld [vmem:[%s1 + $0x18] sm:$0xf]
      %v265 = vld [vmem:[%s1 + $0x1c] sm:$0xf]
      %v266 = vld [vmem:[%s1 + $0x20] sm:$0xf]
      %v267 = vld [vmem:[%s1 + $0x24] sm:$0xf]
      %v268 = vld [vmem:[%s1 + $0x28] sm:$0xf]
      %v269 = vld [vmem:[%s1 + $0x2c] sm:$0xf]
      %v270 = vld [vmem:[%s1 + $0x30] sm:$0xf]
      %v271 = vld [vmem:[%s1 + $0x34] sm:$0xf]
      %v272 = vld [vmem:[%s1 + $0x38] sm:$0xf]
      %v273 = vld [vmem:[%s1 + $0x3c] sm:$0xf]
      %v274 = vld [vmem:[%s2] sm:$0x1]
      %v276 = vperm.slane %v274, 0
      %v294 = vunpack.c.l.b16 %v258
      %v295 = vunpack.c.l.b16 %v259
      %v296 = vunpack.c.l.b16 %v260
      %v297 = vunpack.c.l.b16 %v261
      %v298 = vunpack.c.l.b16 %v262
      %v299 = vunpack.c.l.b16 %v263
      %v300 = vunpack.c.l.b16 %v264
      %v301 = vunpack.c.l.b16 %v265
      %v302 = vunpack.c.l.b16 %v266
      %v303 = vunpack.c.l.b16 %v267
      %v304 = vunpack.c.l.b16 %v268
      %v305 = vunpack.c.l.b16 %v269
      %v306 = vunpack.c.l.b16 %v270
      %v307 = vunpack.c.l.b16 %v271
      %v308 = vunpack.c.l.b16 %v272
      %v309 = vunpack.c.l.b16 %v273
      %v310 = vpack.c.b16 %v295, %v294
      %v311 = vpack.c.b16 %v297, %v296
      %v312 = vpack.c.b16 %v299, %v298
      %v313 = vpack.c.b16 %v301, %v300
      %v314 = vpack.c.b16 %v303, %v302
      %v315 = vpack.c.b16 %v305, %v304
      %v316 = vpack.c.b16 %v307, %v306
      %v317 = vpack.c.b16 %v309, %v308
      %326 = vmatpush.bf16.msra.mxu0 %v317
      %327 = vmatpush.bf16.msra.mxu0 %v316
      %328 = vmatpush.bf16.msra.mxu0 %v315
      %329 = vmatpush.bf16.msra.mxu0 %v314
      %330 = vmatpush.bf16.msra.mxu0 %v313
      %331 = vmatpush.bf16.msra.mxu0 %v312
      %332 = vmatpush.bf16.msra.mxu0 %v311
      %333 = vmatpush.bf16.msra.mxu0 %v310
      %334 = vmatmul.bf16.gmra.mxu0 %v257
      %v335 = vpop.f32.mrf.mxu0
      %v336 = vadd.f32 %v276, %v335
      %v337 = vpop.f32.mrf.mxu0
      %v338 = vadd.f32 %v276, %v337
      %339 = vdwg.mxu0
      %v340 = vmax.f32 %v336, 0.0
      %v341 = vmax.f32 %v338, 0.0
      %v342 = vld [vmem:[%s3] sm:$0x1]
      %v344 = vperm.slane %v342, 0
      %v346 = vmul.f32 %v340, %v344
      %v347 = vmul.f32 %v341, %v344
      %v348 = vpack.c.bf16 %v347, %v346
      %v349 = vld [vmem:[%s4] sm:$0xf]
      %v350 = vld [vmem:[%s4 + $0x4] sm:$0xf]
      %v351 = vld [vmem:[%s4 + $0x8] sm:$0xf]
      %v352 = vld [vmem:[%s4 + $0xc] sm:$0xf]
      %v353 = vld [vmem:[%s4 + $0x10] sm:$0xf]
      %v354 = vld [vmem:[%s4 + $0x14] sm:$0xf]
      %v355 = vld [vmem:[%s4 + $0x18] sm:$0xf]
      %v356 = vld [vmem:[%s4 + $0x1c] sm:$0xf]
      %v357 = vld [vmem:[%s4 + $0x20] sm:$0xf]
      %v358 = vld [vmem:[%s4 + $0x24] sm:$0xf]
      %v359 = vld [vmem:[%s4 + $0x28] sm:$0xf]
      %v360 = vld [vmem:[%s4 + $0x2c] sm:$0xf]
      %v361 = vld [vmem:[%s4 + $0x30] sm:$0xf]
      %v362 = vld [vmem:[%s4 + $0x34] sm:$0xf]
      %v363 = vld [vmem:[%s4 + $0x38] sm:$0xf]
      %v364 = vld [vmem:[%s4 + $0x3c] sm:$0xf]
      %v365 = vld [vmem:[%s5] sm:$0x1]
      %v367 = vperm.slane %v365, 0
      %v385 = vunpack.c.l.b16 %v349
      %v386 = vunpack.c.l.b16 %v350
      %v387 = vunpack.c.l.b16 %v351
      %v388 = vunpack.c.l.b16 %v352
      %v389 = vunpack.c.l.b16 %v353
      %v390 = vunpack.c.l.b16 %v354
      %v391 = vunpack.c.l.b16 %v355
      %v392 = vunpack.c.l.b16 %v356
      %v393 = vunpack.c.l.b16 %v357
      %v394 = vunpack.c.l.b16 %v358
      %v395 = vunpack.c.l.b16 %v359
      %v396 = vunpack.c.l.b16 %v360
      %v397 = vunpack.c.l.b16 %v361
      %v398 = vunpack.c.l.b16 %v362
      %v399 = vunpack.c.l.b16 %v363
      %v400 = vunpack.c.l.b16 %v364
      %v401 = vpack.c.b16 %v386, %v385
      %v402 = vpack.c.b16 %v388, %v387
      %v403 = vpack.c.b16 %v390, %v389
      %v404 = vpack.c.b16 %v392, %v391
      %v405 = vpack.c.b16 %v394, %v393
      %v406 = vpack.c.b16 %v396, %v395
      %v407 = vpack.c.b16 %v398, %v397
      %v408 = vpack.c.b16 %v400, %v399
      %417 = vmatpush.bf16.msra.mxu0 %v408
      %418 = vmatpush.bf16.msra.mxu0 %v407
      %419 = vmatpush.bf16.msra.mxu0 %v406
      %420 = vmatpush.bf16.msra.mxu0 %v405
      %421 = vmatpush.bf16.msra.mxu0 %v404
      %422 = vmatpush.bf16.msra.mxu0 %v403
      %423 = vmatpush.bf16.msra.mxu0 %v402
      %424 = vmatpush.bf16.msra.mxu0 %v401
      %425 = vmatmul.bf16.gmra.mxu0 %v348
      %v426 = vpop.f32.mrf.mxu0
      %v427 = vadd.f32 %v367, %v426
      %v428 = vpop.f32.mrf.mxu0
      %v429 = vadd.f32 %v367, %v428
      %430 = vdwg.mxu0
      %431 = vst [vmem:[%s253] sm:$0xff] %v427
      %432 = vst [vmem:[%s253 + $0x8] sm:$0xff] %v429
      %s433 = smul.u32 2, %s17
      %p434 = scmp.lt.s32.totalorder %s433, 3
      %s435 = scalar_select %p434, %s433, 3
      %s436 = smul.addr %s435, 8
      %s437 = scalar_lea.vmem %s6, %s436
      // Predicated region
      $region45: #{ffn_forward.3} parent=43 // pred_check
        %p438 = pneg %p166
      $region46: #{ffn_forward.3} parent=43 // pred_check_branch
        %440 = sbr.rel (%p438) target = $region48
      $region47: #{ffn_forward.3} parent=43 // pred_region
        %s441 = smul.u32 2, %s17
      $region48: #{ffn_forward.3} parent=43 // pred_fallthru
        _
    $region44: #{ffn_forward.3} parent=5 // pred_fallthru
      _
    %p442 = scmp.le.s32.totalorder 2, %s12
    // Predicated region
    $region49: #{ffn_forward.3} parent=5 // pred_check
      %p443 = pneg %p442
    $region50: #{ffn_forward.3} parent=5 // pred_check_branch
      %445 = sbr.rel (%p443) target = $region52
    $region51: #{ffn_forward.3} parent=5 // pred_region
      %s446 = ssub.s32 %s12, 2
      // Predicated region
      $region53: #{ffn_forward.3} parent=51 // pred_check
        %p447 = pneg %p172
      $region54: #{ffn_forward.3} parent=51 // pred_check_branch
        %449 = sbr.rel (%p447) target = $region56
      $region55: #{ffn_forward.3} parent=51 // pred_region
        %s450 = smul.u32 2, %s18
        %p451 = scmp.lt.s32.totalorder %s450, 3
        %s452 = scalar_select %p451, %s450, 3
        %s453 = smul.addr %s452, 8
        %s454 = scalar_lea.vmem %s6, %s453
      $region56: #{ffn_forward.3} parent=51 // pred_fallthru
        _
    $region52: #{ffn_forward.3} parent=5 // pred_fallthru
      _
  $region6: #{ffn_forward.3} parent=0 // loop_footer
    %s16 = sadd.s32 1, %s12
  $region7: #{ffn_forward.3} parent=0 // loop_footer_branch
    %11 = sbr.rel target = $region3
  $region8: #{ffn_forward.3} parent=0 // loop_exit
    _

</llo_original>
